<compile_context>
chip_gen: v7x
topology: tpu7x:2x2x1
jax: 0.10.0
libtpu: 0.0.40
codegen_flags: <defaults>
</compile_context>

<pallas_src>
import functools

import jax
import jax.numpy as jnp
from jax.experimental import pallas as pl
from jax.experimental.pallas import tpu as pltpu


def _round_up(x, m):
    return ((x + m - 1) // m) * m


def _cdiv(a, b):
    return -(-a // b)


def _is_v7x():
    try:
        kind = jax.devices()[0].device_kind.lower()
    except Exception:
        kind = ""
    return "v7" in kind


# ---------------------------------------------------------------------------
# Main path: single fused pass, whole images per block (HW on lanes).
# ---------------------------------------------------------------------------
def _se_fusion_kernel(inv_hw, channels,
                      rgb_ref, depth_ref, w1_ref, b1_ref, w2_ref, b2_ref,
                      out_ref):
    rgb = rgb_ref[...]            # (NB, C, HW) native dtype — no f32 copy held
    depth = depth_ref[...]

    # Global average pool: lane reduction with f32 accumulation. Block last
    # dim equals the logical HW, so padded lanes are masked by Mosaic.
    pooled_r = jnp.sum(rgb, axis=-1, dtype=jnp.float32) * inv_hw      # (NB, C)
    pooled_d = jnp.sum(depth, axis=-1, dtype=jnp.float32) * inv_hw    # (NB, C)
    pooled = jnp.concatenate([pooled_r, pooled_d], axis=-1)           # (NB, 2C)

    # Both modalities' FCs fused via block-diagonal weights.
    h = jnp.dot(pooled, w1_ref[...], preferred_element_type=jnp.float32)
    h = jnp.maximum(h + b1_ref[...], 0.0)                             # (NB, 2Cr)
    s = jnp.dot(h, w2_ref[...], preferred_element_type=jnp.float32)
    s = jax.nn.sigmoid(s + b2_ref[...])                               # (NB, 2C)

    s_r = s[:, :channels][:, :, None]
    s_d = s[:, channels:][:, :, None]

    # Single fused broadcast-multiply-add chain; one lane-dense store.
    out_ref[...] = (rgb * s_r + depth * s_d).astype(out_ref.dtype)


# ---------------------------------------------------------------------------
# Fallback path (large images / forced): two phases tiled over HW.
# ---------------------------------------------------------------------------
def _pool_gate_kernel(inv_hw, hw, hw_tile,
                      rgb_ref, depth_ref, w1_ref, b1_ref, w2_ref, b2_ref,
                      gates_ref, acc_r, acc_d):
    j = pl.program_id(1)

    @pl.when(j == 0)
    def _():
        acc_r[...] = jnp.zeros_like(acc_r)
        acc_d[...] = jnp.zeros_like(acc_d)

    # Mask the (possibly partial) last HW tile explicitly: OOB block contents
    # are unspecified and must not reach the pool sum.
    lane = jax.lax.broadcasted_iota(jnp.int32, rgb_ref.shape, 2)
    valid = (j * hw_tile + lane) < hw
    acc_r[...] += jnp.sum(jnp.where(valid, rgb_ref[...], 0), axis=-1,
                          dtype=jnp.float32)
    acc_d[...] += jnp.sum(jnp.where(valid, depth_ref[...], 0), axis=-1,
                          dtype=jnp.float32)

    @pl.when(j == pl.num_programs(1) - 1)
    def _():
        pooled = jnp.concatenate([acc_r[...], acc_d[...]], axis=-1) * inv_hw
        h = jnp.dot(pooled, w1_ref[...], preferred_element_type=jnp.float32)
        h = jnp.maximum(h + b1_ref[...], 0.0)
        s = jnp.dot(h, w2_ref[...], preferred_element_type=jnp.float32)
        s = jax.nn.sigmoid(s + b2_ref[...])                           # (NB, 2C)
        gates_ref[...] = s[:, None, :]


def _apply_gates_kernel(channels, rgb_ref, depth_ref, gates_ref, out_ref):
    g = gates_ref[...][:, 0, :]                                       # (NB, 2C)
    s_r = g[:, :channels][:, :, None]
    s_d = g[:, channels:][:, :, None]
    out_ref[...] = (rgb_ref[...] * s_r + depth_ref[...] * s_d).astype(out_ref.dtype)


# ---------------------------------------------------------------------------
# Wrapper
# ---------------------------------------------------------------------------
def _block_diag(a, b):
    za = jnp.zeros((a.shape[0], b.shape[1]), a.dtype)
    zb = jnp.zeros((b.shape[0], a.shape[1]), b.dtype)
    return jnp.concatenate(
        [jnp.concatenate([a, za], axis=1), jnp.concatenate([zb, b], axis=1)],
        axis=0)


def squeeze_excite_fusion_add(rgb, depth, params, *,
                              act_block_bytes=None, force_spatial=False):
    """rgb, depth: (N, C, H, W) (NCHW, matching PyTorch). Returns (N, C, H, W)."""
    N, C, H, W = rgb.shape
    HW = H * W
    inv_hw = 1.0 / HW
    itemsize = jnp.dtype(rgb.dtype).itemsize

    (w1r, b1r, w2r, b2r, w1d, b1d, w2d, b2d) = params
    # Fuse the two modalities' FCs: block-diagonal weights + concatenated
    # biases, so pooled = [pool(rgb) | pool(depth)] goes through one FC pair.
    w1 = _block_diag(w1r.T, w1d.T).astype(jnp.float32)                # (2C, 2Cr)
    w2 = _block_diag(w2r.T, w2d.T).astype(jnp.float32)                # (2Cr, 2C)
    b1 = jnp.concatenate([b1r.reshape(1, -1), b1d.reshape(1, -1)],
                         axis=1).astype(jnp.float32)                  # (1, 2Cr)
    b2 = jnp.concatenate([b2r.reshape(1, -1), b2d.reshape(1, -1)],
                         axis=1).astype(jnp.float32)                  # (1, 2C)

    # (N, C, H, W) -> (N, C, HW): collapsing adjacent dims is free (bitcast);
    # no padding and no extra HBM pass.
    rgb2 = rgb.reshape(N, C, HW)
    depth2 = depth.reshape(N, C, HW)

    is_v7 = _is_v7x()
    if act_block_bytes is None:
        # Per-activation-block budget. v7x: 64 MiB VMEM / TC, 6 double-buffered
        # blocks -> ~5 MiB each. v5e/v6e: 128 MiB VMEM -> take big blocks.
        act_block_bytes = (5 << 20) if is_v7 else (14 << 20)

    # Account blocks in f32 (compute dtype), padded to the (8, 128) tile.
    cp = _round_up(C, 8)
    hwl = _round_up(HW, 128)
    per_image = cp * hwl * 4

    weight_bytes = 2 * 4 * int(w1.size + w2.size + b1.size + b2.size)
    vmem_cap = (42 << 20) if is_v7 else (96 << 20)

    def _compiler_params(n_blocks, block_bytes, semantics):
        limit = n_blocks * block_bytes + weight_bytes + (4 << 20)
        limit = int(min(max(limit, 32 << 20), vmem_cap))
        return pltpu.CompilerParams(dimension_semantics=semantics,
                                    vmem_limit_bytes=limit)

    cost = pl.CostEstimate(
        flops=int(5 * N * C * HW + 8 * N * C * max(w1.shape[1] // 2, 1)),
        transcendentals=int(2 * N * C),
        bytes_accessed=int(3 * N * C * HW * itemsize),
    )

    use_spatial = force_spatial or per_image > act_block_bytes

    if not use_spatial:
        # ------------------- single fused pass ---------------------------
        nb = max(1, min(N, act_block_bytes // per_image))
        if is_v7 and N >= 2:
            nb = min(nb, _cdiv(N, 2))   # keep >=2 steps for v7x's two TCs
        n_steps = _cdiv(N, nb)

        act_spec = pl.BlockSpec((nb, C, HW), lambda n: (n, 0, 0))

        def _full(shape):
            r = len(shape)
            return pl.BlockSpec(shape, lambda n: (0,) * r)

        out = pl.pallas_call(
            functools.partial(_se_fusion_kernel, inv_hw, C),
            out_shape=jax.ShapeDtypeStruct((N, C, HW), rgb.dtype),
            grid_spec=pltpu.PrefetchScalarGridSpec(
                num_scalar_prefetch=0,
                grid=(n_steps,),
                in_specs=[act_spec, act_spec,
                          _full(w1.shape), _full(b1.shape),
                          _full(w2.shape), _full(b2.shape)],
                out_specs=act_spec,
            ),
            compiler_params=_compiler_params(6, nb * per_image, ("parallel",)),
            cost_estimate=cost,
        )(rgb2, depth2, w1, b1, w2, b2)
        return out.reshape(N, C, H, W)

    # -------- spatially tiled two-phase fallback (big images / v7x) --------
    nb_s = 1
    hw_tile = max(128, (act_block_bytes // (cp * 4)) // 128 * 128)
    if hw_tile >= HW:
        hw_tile = HW
    n_hw = _cdiv(HW, hw_tile)
    n_b = _cdiv(N, nb_s)
    blk = nb_s * cp * _round_up(hw_tile, 128) * 4

    act_spec = pl.BlockSpec((nb_s, C, hw_tile), lambda i, j: (i, 0, j))
    gate_spec = pl.BlockSpec((nb_s, 1, 2 * C), lambda i, j: (i, 0, 0))

    def _full2(shape):
        r = len(shape)
        return pl.BlockSpec(shape, lambda i, j: (0,) * r)

    # Phase 1: accumulate per-channel pool sums over HW tiles, emit gates.
    gates = pl.pallas_call(
        functools.partial(_pool_gate_kernel, inv_hw, HW, hw_tile),
        out_shape=jax.ShapeDtypeStruct((N, 1, 2 * C), jnp.float32),
        grid_spec=pltpu.PrefetchScalarGridSpec(
            num_scalar_prefetch=0,
            grid=(n_b, n_hw),
            in_specs=[act_spec, act_spec,
                      _full2(w1.shape), _full2(b1.shape),
                      _full2(w2.shape), _full2(b2.shape)],
            out_specs=gate_spec,
            scratch_shapes=[pltpu.VMEM((nb_s, C), jnp.float32),
                            pltpu.VMEM((nb_s, C), jnp.float32)],
        ),
        compiler_params=_compiler_params(4, blk, ("parallel", "arbitrary")),
        cost_estimate=pl.CostEstimate(
            flops=int(2 * N * C * HW),
            transcendentals=int(2 * N * C),
            bytes_accessed=int(2 * N * C * HW * itemsize)),
    )(rgb2, depth2, w1, b1, w2, b2)

    # Phase 2: apply gates + add, tiled over HW (both grid axes parallel).
    out = pl.pallas_call(
        functools.partial(_apply_gates_kernel, C),
        out_shape=jax.ShapeDtypeStruct((N, C, HW), rgb.dtype),
        grid_spec=pltpu.PrefetchScalarGridSpec(
            num_scalar_prefetch=0,
            grid=(n_b, n_hw),
            in_specs=[act_spec, act_spec, gate_spec],
            out_specs=act_spec,
        ),
        compiler_params=_compiler_params(6, blk, ("parallel", "parallel")),
        cost_estimate=cost,
    )(rgb2, depth2, gates)
    return out.reshape(N, C, H, W)


# ---------------------------------------------------------------------------
# Params / reference / self-test
# ---------------------------------------------------------------------------
def _init_params(key, channels, reduction=16):
    hidden = channels // reduction
    ks = jax.random.split(key, 8)
    scale1 = 1.0 / jnp.sqrt(channels)
    scale2 = 1.0 / jnp.sqrt(hidden)
    w1r = (jax.random.normal(ks[0], (hidden, channels)) * scale1).astype(jnp.float32)
    b1r = (jax.random.normal(ks[1], (hidden, 1)) * scale1).astype(jnp.float32)
    w2r = (jax.random.normal(ks[2], (channels, hidden)) * scale2).astype(jnp.float32)
    b2r = (jax.random.normal(ks[3], (channels, 1)) * scale2).astype(jnp.float32)
    w1d = (jax.random.normal(ks[4], (hidden, channels)) * scale1).astype(jnp.float32)
    b1d = (jax.random.normal(ks[5], (hidden, 1)) * scale1).astype(jnp.float32)
    w2d = (jax.random.normal(ks[6], (channels, hidden)) * scale2).astype(jnp.float32)
    b2d = (jax.random.normal(ks[7], (channels, 1)) * scale2).astype(jnp.float32)
    return (w1r, b1r, w2r, b2r, w1d, b1d, w2d, b2d)


def _reference(rgb, depth, params):
    (w1r, b1r, w2r, b2r, w1d, b1d, w2d, b2d) = params

    def se(x, w1, b1, w2, b2):
        pooled = x.mean(axis=(2, 3))                                 # (N, C)
        h = jax.nn.relu(pooled @ w1.T + b1.reshape(1, -1))           # (N, Cr)
        s = jax.nn.sigmoid(h @ w2.T + b2.reshape(1, -1))             # (N, C)
        return x * s[:, :, None, None]

    return se(rgb, w1r, b1r, w2r, b2r) + se(depth, w1d, b1d, w2d, b2d)


if __name__ == "__main__":
    key = jax.random.PRNGKey(0)
    k_rgb, k_depth, k_par, k_rgb2, k_depth2, k_par2 = jax.random.split(key, 6)

    # -- main (single fused pass) path: N=2, C=32, 16x16 --------------------
    N, C, H, W = 2, 32, 16, 16
    rgb = jax.random.normal(k_rgb, (N, C, H, W), dtype=jnp.float32)
    depth = jax.random.normal(k_depth, (N, C, H, W), dtype=jnp.float32)
    params = _init_params(k_par, C, reduction=16)

    out = jax.block_until_ready(squeeze_excite_fusion_add(rgb, depth, params))
    ref = _reference(rgb, depth, params)
    assert out.shape == (N, C, H, W)
    assert jnp.allclose(out, ref, atol=1e-5, rtol=1e-5), "mismatch (main path)"

    # -- main path with a partial trailing batch block (no wrapper padding) --
    rgb3 = jnp.concatenate([rgb, rgb[:1] * 0.5], axis=0)              # N=3
    depth3 = jnp.concatenate([depth, depth[:1] * -0.25], axis=0)
    out3 = jax.block_until_ready(
        squeeze_excite_fusion_add(rgb3, depth3, params,
                                  act_block_bytes=70 * 1024))
    ref3 = _reference(rgb3, depth3, params)
    assert jnp.allclose(out3, ref3, atol=1e-5, rtol=1e-5), "mismatch (partial batch)"

    # -- spatially tiled two-phase fallback (forced small budget) -----------
    N2, C2, H2, W2 = 2, 16, 10, 13        # HW=130 -> masked partial HW tile
    rgb_s = jax.random.normal(k_rgb2, (N2, C2, H2, W2), dtype=jnp.float32)
    depth_s = jax.random.normal(k_depth2, (N2, C2, H2, W2), dtype=jnp.float32)
    params_s = _init_params(k_par2, C2, reduction=16)
    out_s = jax.block_until_ready(
        squeeze_excite_fusion_add(rgb_s, depth_s, params_s,
                                  act_block_bytes=8 * 1024,
                                  force_spatial=True))
    ref_s = _reference(rgb_s, depth_s, params_s)
    assert out_s.shape == (N2, C2, H2, W2)
    assert jnp.allclose(out_s, ref_s, atol=1e-5, rtol=1e-5), "mismatch (spatial path)"

    print("KERNEL_OK")
</pallas_src>

<mosaic_0001>
module attributes {stable_mosaic.version = 11 : i64} {
  func.func @_se_fusion_kernel(%arg0: i32, %arg1: memref<2x32x256xf32, #tpu.memory_space<vmem>>, %arg2: memref<2x32x256xf32, #tpu.memory_space<vmem>>, %arg3: memref<64x4xf32, #tpu.memory_space<vmem>>, %arg4: memref<1x4xf32, #tpu.memory_space<vmem>>, %arg5: memref<4x64xf32, #tpu.memory_space<vmem>>, %arg6: memref<1x64xf32, #tpu.memory_space<vmem>>, %arg7: memref<2x32x256xf32, #tpu.memory_space<vmem>>) attributes {dimension_semantics = [#tpu.dimension_semantics<parallel>], iteration_bounds = array<i64: 1>, scalar_prefetch = 0 : i64, scratch_operands = 0 : i64, tpu.core_type = #tpu.core_type<tc>, window_params = [{transform_indices = @transform_0, window_bounds = array<i64: 2, 32, 256>}, {transform_indices = @transform_1, window_bounds = array<i64: 2, 32, 256>}, {pipeline_mode = #tpu.pipeline_mode<synchronous>, transform_indices = @transform_2, window_bounds = array<i64: 64, 4>}, {pipeline_mode = #tpu.pipeline_mode<synchronous>, transform_indices = @transform_3, window_bounds = array<i64: 1, 4>}, {pipeline_mode = #tpu.pipeline_mode<synchronous>, transform_indices = @transform_4, window_bounds = array<i64: 4, 64>}, {pipeline_mode = #tpu.pipeline_mode<synchronous>, transform_indices = @transform_5, window_bounds = array<i64: 1, 64>}, {transform_indices = @transform_6, window_bounds = array<i64: 2, 32, 256>}]} {
    %c0 = arith.constant 0 : index
    %c0_0 = arith.constant 0 : index
    %c0_1 = arith.constant 0 : index
    %0 = vector.load %arg1[%c0, %c0_0, %c0_1] : memref<2x32x256xf32, #tpu.memory_space<vmem>>, vector<2x32x256xf32>
    %c0_2 = arith.constant 0 : index
    %c0_3 = arith.constant 0 : index
    %c0_4 = arith.constant 0 : index
    %1 = vector.load %arg2[%c0_2, %c0_3, %c0_4] : memref<2x32x256xf32, #tpu.memory_space<vmem>>, vector<2x32x256xf32>
    %cst = arith.constant dense<0.000000e+00> : vector<2x32xf32>
    %2 = vector.multi_reduction <add>, %0, %cst [2] : vector<2x32x256xf32> to vector<2x32xf32>
    %cst_5 = arith.constant 3.906250e-03 : f32
    %3 = vector.broadcast %cst_5 : f32 to vector<2x32xf32>
    %4 = arith.mulf %2, %3 : vector<2x32xf32>
    %cst_6 = arith.constant dense<0.000000e+00> : vector<2x32xf32>
    %5 = vector.multi_reduction <add>, %1, %cst_6 [2] : vector<2x32x256xf32> to vector<2x32xf32>
    %cst_7 = arith.constant 3.906250e-03 : f32
    %6 = vector.broadcast %cst_7 : f32 to vector<2x32xf32>
    %7 = arith.mulf %5, %6 : vector<2x32xf32>
    %8 = tpu.concatenate %4, %7 in 1 : vector<2x32xf32>, vector<2x32xf32> -> vector<2x64xf32>
    %c0_8 = arith.constant 0 : index
    %c0_9 = arith.constant 0 : index
    %9 = vector.load %arg3[%c0_8, %c0_9] : memref<64x4xf32, #tpu.memory_space<vmem>>, vector<64x4xf32>
    %cst_10 = arith.constant dense<0.000000e+00> : vector<2x4xf32>
    %10 = tpu.matmul %8, %9, %cst_10 {dimension_numbers = #tpu.dot_dimension_numbers<[1], [0], [0], [1], [0, 0, 1, 1], [], []>} : vector<2x64xf32>, vector<64x4xf32>, vector<2x4xf32> -> vector<2x4xf32>
    %c0_11 = arith.constant 0 : index
    %c0_12 = arith.constant 0 : index
    %11 = vector.load %arg4[%c0_11, %c0_12] : memref<1x4xf32, #tpu.memory_space<vmem>>, vector<1x4xf32>
    %12 = vector.broadcast %11 : vector<1x4xf32> to vector<2x4xf32>
    %13 = arith.addf %10, %12 : vector<2x4xf32>
    %cst_13 = arith.constant 0.000000e+00 : f32
    %14 = vector.broadcast %cst_13 : f32 to vector<2x4xf32>
    %15 = arith.maximumf %13, %14 : vector<2x4xf32>
    %c0_14 = arith.constant 0 : index
    %c0_15 = arith.constant 0 : index
    %16 = vector.load %arg5[%c0_14, %c0_15] : memref<4x64xf32, #tpu.memory_space<vmem>>, vector<4x64xf32>
    %cst_16 = arith.constant dense<0.000000e+00> : vector<2x64xf32>
    %17 = tpu.matmul %15, %16, %cst_16 {dimension_numbers = #tpu.dot_dimension_numbers<[1], [0], [0], [1], [0, 0, 1, 1], [], []>} : vector<2x4xf32>, vector<4x64xf32>, vector<2x64xf32> -> vector<2x64xf32>
    %c0_17 = arith.constant 0 : index
    %c0_18 = arith.constant 0 : index
    %18 = vector.load %arg6[%c0_17, %c0_18] : memref<1x64xf32, #tpu.memory_space<vmem>>, vector<1x64xf32>
    %19 = vector.broadcast %18 : vector<1x64xf32> to vector<2x64xf32>
    %20 = arith.addf %17, %19 : vector<2x64xf32>
    %21 = arith.negf %20 : vector<2x64xf32>
    %22 = math.exp %21 : vector<2x64xf32>
    %cst_19 = arith.constant 1.000000e+00 : f32
    %23 = vector.broadcast %cst_19 : f32 to vector<2x64xf32>
    %24 = arith.addf %23, %22 : vector<2x64xf32>
    %25 = arith.divf %23, %24 : vector<2x64xf32>
    %26 = vector.extract_strided_slice %25 {offsets = [0, 0], sizes = [2, 32], strides = [1, 1]} : vector<2x64xf32> to vector<2x32xf32>
    %27 = vector.shape_cast %26 : vector<2x32xf32> to vector<2x32x1xf32>
    %28 = vector.extract_strided_slice %25 {offsets = [0, 32], sizes = [2, 32], strides = [1, 1]} : vector<2x64xf32> to vector<2x32xf32>
    %29 = vector.shape_cast %28 : vector<2x32xf32> to vector<2x32x1xf32>
    %30 = vector.broadcast %27 : vector<2x32x1xf32> to vector<2x32x256xf32>
    %31 = arith.mulf %0, %30 : vector<2x32x256xf32>
    %32 = vector.broadcast %29 : vector<2x32x1xf32> to vector<2x32x256xf32>
    %33 = arith.mulf %1, %32 : vector<2x32x256xf32>
    %34 = arith.addf %31, %33 : vector<2x32x256xf32>
    %c0_20 = arith.constant 0 : index
    %c0_21 = arith.constant 0 : index
    %c0_22 = arith.constant 0 : index
    %35 = vector.load %arg7[%c0_20, %c0_21, %c0_22] : memref<2x32x256xf32, #tpu.memory_space<vmem>>, vector<2x32x256xf32>
    tpu.vector_store %arg7[%c0_20, %c0_21, %c0_22], %34 {strides = array<i32>} : memref<2x32x256xf32, #tpu.memory_space<vmem>>, vector<2x32x256xf32>,
    return
  }
  func.func @transform_0(%arg0: i32) -> (i32, i32, i32) {
    %c0_i32 = arith.constant 0 : i32
    %c0_i32_0 = arith.constant 0 : i32
    %c0_i32_1 = arith.constant 0 : i32
    return %arg0, %c0_i32, %c0_i32_0 : i32, i32, i32
  }
  func.func @transform_1(%arg0: i32) -> (i32, i32, i32) {
    %c0_i32 = arith.constant 0 : i32
    %c0_i32_0 = arith.constant 0 : i32
    %c0_i32_1 = arith.constant 0 : i32
    return %arg0, %c0_i32, %c0_i32_0 : i32, i32, i32
  }
  func.func @transform_2(%arg0: i32) -> (i32, i32) {
    %c0_i32 = arith.constant 0 : i32
    %c0_i32_0 = arith.constant 0 : i32
    %c0_i32_1 = arith.constant 0 : i32
    return %c0_i32, %c0_i32_0 : i32, i32
  }
  func.func @transform_3(%arg0: i32) -> (i32, i32) {
    %c0_i32 = arith.constant 0 : i32
    %c0_i32_0 = arith.constant 0 : i32
    %c0_i32_1 = arith.constant 0 : i32
    return %c0_i32, %c0_i32_0 : i32, i32
  }
  func.func @transform_4(%arg0: i32) -> (i32, i32) {
    %c0_i32 = arith.constant 0 : i32
    %c0_i32_0 = arith.constant 0 : i32
    %c0_i32_1 = arith.constant 0 : i32
    return %c0_i32, %c0_i32_0 : i32, i32
  }
  func.func @transform_5(%arg0: i32) -> (i32, i32) {
    %c0_i32 = arith.constant 0 : i32
    %c0_i32_0 = arith.constant 0 : i32
    %c0_i32_1 = arith.constant 0 : i32
    return %c0_i32, %c0_i32_0 : i32, i32
  }
  func.func @transform_6(%arg0: i32) -> (i32, i32, i32) {
    %c0_i32 = arith.constant 0 : i32
    %c0_i32_0 = arith.constant 0 : i32
    %c0_i32_1 = arith.constant 0 : i32
    return %arg0, %c0_i32, %c0_i32_0 : i32, i32, i32
  }
}

</mosaic_0001>

<llo_original>
// kernel: tpu_custom_call.1
$region0: #{tpu_custom_call.1}
  #allocation0 [shape = 'u32[]', space=smem, size = 0x4, offset = 0x4, fixed_abs, tag = 'smem constant byte address 0x4 - core index']
  #allocation1 [shape = 'u32[144,128]{1,0:T(1,128)}', space=vmem, size = 0x12000, scoped, tag = 'internal scratch']
  %s0 = inlined_call_operand.hbm [shape: f32[2,32,256], index: 0, kind: input, shape index: {}]
  %s1 = inlined_call_operand.hbm [shape: f32[2,32,256], index: 1, kind: input, shape index: {}]
  %s2 = inlined_call_operand.vmem [shape: f32[64,4], index: 2, kind: input, shape index: {}]
  %s3 = inlined_call_operand.vmem [shape: f32[1,4], index: 3, kind: input, shape index: {}]
  %s4 = inlined_call_operand.vmem [shape: f32[4,64], index: 4, kind: input, shape index: {}]
  %s5 = inlined_call_operand.vmem [shape: f32[1,64], index: 5, kind: input, shape index: {}]
  %s6 = inlined_call_operand.hbm [shape: f32[2,32,256], index: 6, kind: output, shape index: {}]
  %s7 = sld [smem:[#allocation0]]
  $region42: #{tpu_custom_call.1} parent=0
    _
  %s9 = ssub.s32 1, %s7
  %s10 = scalar_select 0, %s9, %s7
  $region1: #{tpu_custom_call.1} parent=0
    #allocation2 [shape = 'u8[65536]{0}', space=vmem, size = 0x10000, scoped, tag = 'input window, operand 0, single buffered']
    #allocation3 [shape = 's32[1]{0}', space=sflag, size = 0x4, scoped, tag = 'scoped memory for tpu_custom_call.1']
    #allocation4 [shape = 's32[1]{0}', space=sflag, size = 0x4, scoped, tag = 'scoped memory for tpu_custom_call.1']
    #allocation5 [shape = 'u8[65536]{0}', space=vmem, size = 0x10000, scoped, tag = 'input window, operand 1, single buffered']
    #allocation6 [shape = 's32[1]{0}', space=sflag, size = 0x4, scoped, tag = 'scoped memory for tpu_custom_call.1']
    #allocation7 [shape = 'u8[65536]{0}', space=vmem, size = 0x10000, scoped, tag = 'output window, operand 0, single buffered']
    %11 = vsyncpa [#allocation3], 0
    %12 = vsyncpa [#allocation6], 0
    %13 = vsyncpa [#allocation4], 0
    // Predicated region
    $region2: #{tpu_custom_call.1} parent=1 // pred_check
      _
    $region3: #{tpu_custom_call.1} parent=1 // pred_check_branch
      %15 = sbr.rel (0) target = $region5
    $region4: #{tpu_custom_call.1} parent=1 // pred_region
      %s17 = ssub.s32 2048, 2048
      %18 = vsyncadd [#allocation3], %s17
      %s19 = sshll.u32 [#allocation2], 4
      %s20 = int_to_ptr.vmem [resolvable:$true] %s19
      %25 = dma.hbm_to_vmem [thread:$0]  %s0, 2048, %s20, [#allocation3], 256, 256, 16
    $region5: #{tpu_custom_call.1} parent=1 // pred_fallthru
      _
    // Predicated region
    $region6: #{tpu_custom_call.1} parent=1 // pred_check
      _
    $region7: #{tpu_custom_call.1} parent=1 // pred_check_branch
      %27 = sbr.rel (0) target = $region9
    $region8: #{tpu_custom_call.1} parent=1 // pred_region
      %s29 = ssub.s32 2048, 2048
      %30 = vsyncadd [#allocation6], %s29
      %s31 = sshll.u32 [#allocation5], 4
      %s32 = int_to_ptr.vmem [resolvable:$true] %s31
      %37 = dma.hbm_to_vmem [thread:$0]  %s1, 2048, %s32, [#allocation6], 256, 256, 16
    $region9: #{tpu_custom_call.1} parent=1 // pred_fallthru
      _
    // Predicated region
    $region10: #{tpu_custom_call.1} parent=1 // pred_check
      _
    $region11: #{tpu_custom_call.1} parent=1 // pred_check_branch
      %39 = sbr.rel (0) target = $region13
    $region12: #{tpu_custom_call.1} parent=1 // pred_region
      _
    $region13: #{tpu_custom_call.1} parent=1 // pred_fallthru
      _
    // Predicated region
    $region14: #{tpu_custom_call.1} parent=1 // pred_check
      _
    $region15: #{tpu_custom_call.1} parent=1 // pred_check_branch
      %41 = sbr.rel (0) target = $region17
    $region16: #{tpu_custom_call.1} parent=1 // pred_region
      _
    $region17: #{tpu_custom_call.1} parent=1 // pred_fallthru
      _
    // Predicated region
    $region18: #{tpu_custom_call.1} parent=1 // pred_check
      _
    $region19: #{tpu_custom_call.1} parent=1 // pred_check_branch
      %43 = sbr.rel (0) target = $region21
    $region20: #{tpu_custom_call.1} parent=1 // pred_region
      _
    $region21: #{tpu_custom_call.1} parent=1 // pred_fallthru
      _
    // Predicated region
    $region22: #{tpu_custom_call.1} parent=1 // pred_check
      _
    $region23: #{tpu_custom_call.1} parent=1 // pred_check_branch
      %45 = sbr.rel (0) target = $region25
    $region24: #{tpu_custom_call.1} parent=1 // pred_region
      _
    $region25: #{tpu_custom_call.1} parent=1 // pred_fallthru
      _
    // Predicated region
    $region26: #{tpu_custom_call.1} parent=1 // pred_check
      _
    $region27: #{tpu_custom_call.1} parent=1 // pred_check_branch
      %47 = sbr.rel (0) target = $region29
    $region28: #{tpu_custom_call.1} parent=1 // pred_region
      %48 = dma.done [#allocation3], 2048
    $region29: #{tpu_custom_call.1} parent=1 // pred_fallthru
      _
    // Predicated region
    $region30: #{tpu_custom_call.1} parent=1 // pred_check
      _
    $region31: #{tpu_custom_call.1} parent=1 // pred_check_branch
      %50 = sbr.rel (0) target = $region33
    $region32: #{tpu_custom_call.1} parent=1 // pred_region
      %51 = dma.done [#allocation6], 2048
    $region33: #{tpu_custom_call.1} parent=1 // pred_fallthru
      _
    %v52 = vld [vmem:[#allocation2] sm:$0xff]
    %v53 = vld [vmem:[#allocation2 + $0x8] sm:$0xff]
    %v54 = vld [vmem:[#allocation2 + $0x10] sm:$0xff]
    %v55 = vld [vmem:[#allocation2 + $0x18] sm:$0xff]
    %v56 = vld [vmem:[#allocation2 + $0x20] sm:$0xff]
    %v57 = vld [vmem:[#allocation2 + $0x28] sm:$0xff]
    %v58 = vld [vmem:[#allocation2 + $0x30] sm:$0xff]
    %v59 = vld [vmem:[#allocation2 + $0x38] sm:$0xff]
    %v60 = vld [vmem:[#allocation2 + $0x40] sm:$0xff]
    %v61 = vld [vmem:[#allocation2 + $0x48] sm:$0xff]
    %v62 = vld [vmem:[#allocation2 + $0x50] sm:$0xff]
    %v63 = vld [vmem:[#allocation2 + $0x58] sm:$0xff]
    %v64 = vld [vmem:[#allocation2 + $0x60] sm:$0xff]
    %v65 = vld [vmem:[#allocation2 + $0x68] sm:$0xff]
    %v66 = vld [vmem:[#allocation2 + $0x70] sm:$0xff]
    %v67 = vld [vmem:[#allocation2 + $0x78] sm:$0xff]
    %v68 = vld [vmem:[#allocation5] sm:$0xff]
    %v69 = vld [vmem:[#allocation5 + $0x8] sm:$0xff]
    %v70 = vld [vmem:[#allocation5 + $0x10] sm:$0xff]
    %v71 = vld [vmem:[#allocation5 + $0x18] sm:$0xff]
    %v72 = vld [vmem:[#allocation5 + $0x20] sm:$0xff]
    %v73 = vld [vmem:[#allocation5 + $0x28] sm:$0xff]
    %v74 = vld [vmem:[#allocation5 + $0x30] sm:$0xff]
    %v75 = vld [vmem:[#allocation5 + $0x38] sm:$0xff]
    %v76 = vld [vmem:[#allocation5 + $0x40] sm:$0xff]
    %v77 = vld [vmem:[#allocation5 + $0x48] sm:$0xff]
    %v78 = vld [vmem:[#allocation5 + $0x50] sm:$0xff]
    %v79 = vld [vmem:[#allocation5 + $0x58] sm:$0xff]
    %v80 = vld [vmem:[#allocation5 + $0x60] sm:$0xff]
    %v81 = vld [vmem:[#allocation5 + $0x68] sm:$0xff]
    %v82 = vld [vmem:[#allocation5 + $0x70] sm:$0xff]
    %v83 = vld [vmem:[#allocation5 + $0x78] sm:$0xff]
    %v84 = vadd.f32 %v52, %v53
    %85 = vadd.xlane.f32.xlu0 %v84
    %v86 = vpop.xlane.xlu0 %85
    %v87 = vadd.f32 %v54, %v55
    %88 = vadd.xlane.f32.xlu0 %v87
    %v89 = vpop.xlane.xlu0 %88
    %v90 = vadd.f32 %v56, %v57
    %91 = vadd.xlane.f32.xlu0 %v90
    %v92 = vpop.xlane.xlu0 %91
    %v93 = vadd.f32 %v58, %v59
    %94 = vadd.xlane.f32.xlu0 %v93
    %v95 = vpop.xlane.xlu0 %94
    %v96 = vadd.f32 %v60, %v61
    %97 = vadd.xlane.f32.xlu0 %v96
    %v98 = vpop.xlane.xlu0 %97
    %v99 = vadd.f32 %v62, %v63
    %100 = vadd.xlane.f32.xlu0 %v99
    %v101 = vpop.xlane.xlu0 %100
    %v102 = vadd.f32 %v64, %v65
    %103 = vadd.xlane.f32.xlu0 %v102
    %v104 = vpop.xlane.xlu0 %103
    %v105 = vadd.f32 %v66, %v67
    %106 = vadd.xlane.f32.xlu0 %v105
    %v107 = vpop.xlane.xlu0 %106
    %v108 = vmul.f32 %v86, 0.00390625
    %v109 = vmul.f32 %v89, 0.00390625
    %v110 = vmul.f32 %v92, 0.00390625
    %v111 = vmul.f32 %v95, 0.00390625
    %v112 = vmul.f32 %v98, 0.00390625
    %v113 = vmul.f32 %v101, 0.00390625
    %v114 = vmul.f32 %v104, 0.00390625
    %v115 = vmul.f32 %v107, 0.00390625
    %v116 = vadd.f32 %v68, %v69
    %117 = vadd.xlane.f32.xlu0 %v116
    %v118 = vpop.xlane.xlu0 %117
    %v119 = vadd.f32 %v70, %v71
    %120 = vadd.xlane.f32.xlu0 %v119
    %v121 = vpop.xlane.xlu0 %120
    %v122 = vadd.f32 %v72, %v73
    %123 = vadd.xlane.f32.xlu0 %v122
    %v124 = vpop.xlane.xlu0 %123
    %v125 = vadd.f32 %v74, %v75
    %126 = vadd.xlane.f32.xlu0 %v125
    %v127 = vpop.xlane.xlu0 %126
    %v128 = vadd.f32 %v76, %v77
    %129 = vadd.xlane.f32.xlu0 %v128
    %v130 = vpop.xlane.xlu0 %129
    %v131 = vadd.f32 %v78, %v79
    %132 = vadd.xlane.f32.xlu0 %v131
    %v133 = vpop.xlane.xlu0 %132
    %v134 = vadd.f32 %v80, %v81
    %135 = vadd.xlane.f32.xlu0 %v134
    %v136 = vpop.xlane.xlu0 %135
    %v137 = vadd.f32 %v82, %v83
    %138 = vadd.xlane.f32.xlu0 %v137
    %v139 = vpop.xlane.xlu0 %138
    %v140 = vmul.f32 %v118, 0.00390625
    %v141 = vmul.f32 %v121, 0.00390625
    %v142 = vmul.f32 %v124, 0.00390625
    %v143 = vmul.f32 %v127, 0.00390625
    %v144 = vmul.f32 %v130, 0.00390625
    %v145 = vmul.f32 %v133, 0.00390625
    %v146 = vmul.f32 %v136, 0.00390625
    %v147 = vmul.f32 %v139, 0.00390625
    %v156 = vlaneseq
    %v157 = vand.u32 %v156, 127
    %v158 = vlaneseq
    %v159 = vshrl.u32 %v158, 7
    %v160 = vsub.s32 %v157, %v159
    %v161 = vrot.slane %v108, %v160
    %v162 = vadd.s32 %v157, 4294967288
    %v163 = vlaneseq
    %v164 = vshrl.u32 %v163, 7
    %v165 = vsub.s32 %v162, %v164
    %v166 = vrot.slane %v109, %v165
    %vm167 = vcmask 130112
    %v168 = vsel %vm167, %v166, %v161
    %v169 = vadd.s32 %v157, 4294967280
    %v170 = vlaneseq
    %v171 = vshrl.u32 %v170, 7
    %v172 = vsub.s32 %v169, %v171
    %v173 = vrot.slane %v110, %v172
    %vm174 = vcmask 195712
    %v175 = vsel %vm174, %v173, %v168
    %v176 = vadd.s32 %v157, 4294967272
    %v177 = vlaneseq
    %v178 = vshrl.u32 %v177, 7
    %v179 = vsub.s32 %v176, %v178
    %v180 = vrot.slane %v111, %v179
    %vm181 = vcmask 261312
    %v182 = vsel %vm181, %v180, %v175
    %v183 = vlaneseq
    %v184 = vshrl.u32 %v183, 7
    %v185 = vsub.s32 %v157, %v184
    %v186 = vrot.slane %v112, %v185
    %v187 = vlaneseq
    %v188 = vshrl.u32 %v187, 7
    %v189 = vsub.s32 %v162, %v188
    %v190 = vrot.slane %v113, %v189
    %v191 = vsel %vm167, %v190, %v186
    %v192 = vlaneseq
    %v193 = vshrl.u32 %v192, 7
    %v194 = vsub.s32 %v169, %v193
    %v195 = vrot.slane %v114, %v194
    %v196 = vsel %vm174, %v195, %v191
    %v197 = vlaneseq
    %v198 = vshrl.u32 %v197, 7
    %v199 = vsub.s32 %v176, %v198
    %v200 = vrot.slane %v115, %v199
    %v201 = vsel %vm181, %v200, %v196
    %vm202 = vcmask 1041409
    %v203 = vsel %vm202, %v201, %v182
    %v213 = vadd.s32 %v157, 4294967264
    %v214 = vlaneseq
    %v215 = vshrl.u32 %v214, 7
    %v216 = vsub.s32 %v213, %v215
    %v217 = vrot.slane %v140, %v216
    %v218 = vadd.s32 %v157, 4294967256
    %v219 = vlaneseq
    %v220 = vshrl.u32 %v219, 7
    %v221 = vsub.s32 %v218, %v220
    %v222 = vrot.slane %v141, %v221
    %vm223 = vcmask 392512
    %v224 = vsel %vm223, %v222, %v217
    %v225 = vadd.s32 %v157, 4294967248
    %v226 = vlaneseq
    %v227 = vshrl.u32 %v226, 7
    %v228 = vsub.s32 %v225, %v227
    %v229 = vrot.slane %v142, %v228
    %vm230 = vcmask 458112
    %v231 = vsel %vm230, %v229, %v224
    %v232 = vadd.s32 %v157, 4294967240
    %v233 = vlaneseq
    %v234 = vshrl.u32 %v233, 7
    %v235 = vsub.s32 %v232, %v234
    %v236 = vrot.slane %v143, %v235
    %vm237 = vcmask 523712
    %v238 = vsel %vm237, %v236, %v231
    %v239 = vlaneseq
    %v240 = vshrl.u32 %v239, 7
    %v241 = vsub.s32 %v213, %v240
    %v242 = vrot.slane %v144, %v241
    %v243 = vlaneseq
    %v244 = vshrl.u32 %v243, 7
    %v245 = vsub.s32 %v218, %v244
    %v246 = vrot.slane %v145, %v245
    %v247 = vsel %vm223, %v246, %v242
    %v248 = vlaneseq
    %v249 = vshrl.u32 %v248, 7
    %v250 = vsub.s32 %v225, %v249
    %v251 = vrot.slane %v146, %v250
    %v252 = vsel %vm230, %v251, %v247
    %v253 = vlaneseq
    %v254 = vshrl.u32 %v253, 7
    %v255 = vsub.s32 %v232, %v254
    %v256 = vrot.slane %v147, %v255
    %v257 = vsel %vm237, %v256, %v252
    %v258 = vsel %vm202, %v257, %v238
    %vm260 = vcmask 261120
    %v261 = vsel %vm260, %v203, %v258
    %v262 = vld [vmem:[%s2] sm:$0xff]
    %v263 = vld [vmem:[%s2 + $0x8] sm:$0xff]
    %v264 = vld [vmem:[%s2 + $0x10] sm:$0xff]
    %v265 = vld [vmem:[%s2 + $0x18] sm:$0xff]
    %v266 = vld [vmem:[%s2 + $0x20] sm:$0xff]
    %v267 = vld [vmem:[%s2 + $0x28] sm:$0xff]
    %v268 = vld [vmem:[%s2 + $0x30] sm:$0xff]
    %v269 = vld [vmem:[%s2 + $0x38] sm:$0xff]
    %v270 = vld [vmem:[%s3] sm:$0x1]
    %v272 = vlaneseq
    %v273 = vshrl.u32 %v272, 7
    %v274 = vsub.s32 0, %v273
    %v275 = vrot.slane %v270, %v274
    %vm277 = vcmask 523264
    %v279 = vsel %vm277, %v261, 0
    %281 = vmatprep.subr.mxu0 0.0
    %282 = vmatpush1.msra.mxu0 %v262
    %283 = vmatprep.subr.mxu0 0.0
    %284 = vmatpush1.msra.mxu0 %v263
    %285 = vmatprep.subr.mxu0 0.0
    %286 = vmatpush1.msra.mxu0 %v264
    %287 = vmatprep.subr.mxu0 0.0
    %288 = vmatpush1.msra.mxu0 %v265
    %289 = vmatprep.subr.mxu0 0.0
    %290 = vmatpush1.msra.mxu0 %v266
    %291 = vmatprep.subr.mxu0 0.0
    %292 = vmatpush1.msra.mxu0 %v267
    %293 = vmatprep.subr.mxu0 0.0
    %294 = vmatpush1.msra.mxu0 %v268
    %295 = vmatprep.subr.mxu0 0.0
    %296 = vmatpush1.msra.mxu0 %v269
    %297 = vmatprep.subr.mxu0 0.0
    %298 = vmatpush1.msra.mxu0 0.0
    %299 = vmatprep.subr.mxu0 0.0
    %300 = vmatpush1.msra.mxu0 0.0
    %301 = vmatprep.subr.mxu0 0.0
    %302 = vmatpush1.msra.mxu0 0.0
    %303 = vmatprep.subr.mxu0 0.0
    %304 = vmatpush1.msra.mxu0 0.0
    %305 = vmatprep.subr.mxu0 0.0
    %306 = vmatpush1.msra.mxu0 0.0
    %307 = vmatprep.subr.mxu0 0.0
    %308 = vmatpush1.msra.mxu0 0.0
    %309 = vmatprep.subr.mxu0 0.0
    %310 = vmatpush1.msra.mxu0 0.0
    %311 = vmatprep.subr.mxu0 0.0
    %312 = vmatpush1.msra.mxu0 0.0
    %313 = vmatprep.subr.mxu0 0.0
    %314 = vmatpush1.msra.mxu0 0.0
    %315 = vmatprep.subr.mxu0 0.0
    %316 = vmatpush1.msra.mxu0 0.0
    %317 = vmatprep.subr.mxu0 0.0
    %318 = vmatpush1.msra.mxu0 0.0
    %319 = vmatprep.subr.mxu0 0.0
    %320 = vmatpush1.msra.mxu0 0.0
    %321 = vmatprep.subr.mxu0 0.0
    %322 = vmatpush1.msra.mxu0 0.0
    %323 = vmatprep.subr.mxu0 0.0
    %324 = vmatpush1.msra.mxu0 0.0
    %325 = vmatprep.subr.mxu0 0.0
    %326 = vmatpush1.msra.mxu0 0.0
    %327 = vmatprep.subr.mxu0 0.0
    %328 = vmatpush1.msra.mxu0 0.0
    %329 = vmatprep.subr.mxu0 0.0
    %330 = vmatpush1.msra.mxu0 0.0
    %331 = vmatprep.subr.mxu0 0.0
    %332 = vmatpush1.msra.mxu0 0.0
    %333 = vmatprep.subr.mxu0 0.0
    %334 = vmatpush1.msra.mxu0 0.0
    %335 = vmatprep.subr.mxu0 0.0
    %336 = vmatpush1.msra.mxu0 0.0
    %337 = vmatprep.subr.mxu0 0.0
    %338 = vmatpush1.msra.mxu0 0.0
    %339 = vmatprep.subr.mxu0 0.0
    %340 = vmatpush1.msra.mxu0 0.0
    %341 = vmatprep.subr.mxu0 0.0
    %342 = vmatpush1.msra.mxu0 0.0
    %343 = vmatprep.subr.mxu0 0.0
    %344 = vmatpush1.msra.mxu0 0.0
    %345 = vmatprep.mubr.f32.mxu0 0.0
    %346 = vmatmul.mubr.f32.gmra.mrb[0].mxu0 %v279
    %v347 = vpop.f32.mrb[0].mxu0
    %v348 = vadd.f32 %v275, %v347
    %v349 = vpop.f32.mrb[0].mxu0
    %350 = vdwg.mxu0
    %v351 = vmax.f32 %v348, 0.0
    %v352 = vld [vmem:[%s4] sm:$0xf]
    %v353 = vld [vmem:[%s5] sm:$0x1]
    %v355 = vlaneseq
    %v356 = vshrl.u32 %v355, 7
    %v357 = vsub.s32 0, %v356
    %v358 = vrot.slane %v353, %v357
    %vm360 = vcmask 31744
    %v362 = vsel %vm360, %v351, 0
    %vm364 = vcmask 1043456
    %v366 = vsel %vm364, %v352, 0
    %368 = vmatprep.subr.mxu0 0.0
    %369 = vmatpush1.msra.mxu0 %v366
    %370 = vmatprep.subr.mxu0 0.0
    %371 = vmatpush1.msra.mxu0 0.0
    %372 = vmatprep.subr.mxu0 0.0
    %373 = vmatpush1.msra.mxu0 0.0
    %374 = vmatprep.subr.mxu0 0.0
    %375 = vmatpush1.msra.mxu0 0.0
    %376 = vmatprep.subr.mxu0 0.0
    %377 = vmatpush1.msra.mxu0 0.0
    %378 = vmatprep.subr.mxu0 0.0
    %379 = vmatpush1.msra.mxu0 0.0
    %380 = vmatprep.subr.mxu0 0.0
    %381 = vmatpush1.msra.mxu0 0.0
    %382 = vmatprep.subr.mxu0 0.0
    %383 = vmatpush1.msra.mxu0 0.0
    %384 = vmatprep.subr.mxu0 0.0
    %385 = vmatpush1.msra.mxu0 0.0
    %386 = vmatprep.subr.mxu0 0.0
    %387 = vmatpush1.msra.mxu0 0.0
    %388 = vmatprep.subr.mxu0 0.0
    %389 = vmatpush1.msra.mxu0 0.0
    %390 = vmatprep.subr.mxu0 0.0
    %391 = vmatpush1.msra.mxu0 0.0
    %392 = vmatprep.subr.mxu0 0.0
    %393 = vmatpush1.msra.mxu0 0.0
    %394 = vmatprep.subr.mxu0 0.0
    %395 = vmatpush1.msra.mxu0 0.0
    %396 = vmatprep.subr.mxu0 0.0
    %397 = vmatpush1.msra.mxu0 0.0
    %398 = vmatprep.subr.mxu0 0.0
    %399 = vmatpush1.msra.mxu0 0.0
    %400 = vmatprep.subr.mxu0 0.0
    %401 = vmatpush1.msra.mxu0 0.0
    %402 = vmatprep.subr.mxu0 0.0
    %403 = vmatpush1.msra.mxu0 0.0
    %404 = vmatprep.subr.mxu0 0.0
    %405 = vmatpush1.msra.mxu0 0.0
    %406 = vmatprep.subr.mxu0 0.0
    %407 = vmatpush1.msra.mxu0 0.0
    %408 = vmatprep.subr.mxu0 0.0
    %409 = vmatpush1.msra.mxu0 0.0
    %410 = vmatprep.subr.mxu0 0.0
    %411 = vmatpush1.msra.mxu0 0.0
    %412 = vmatprep.subr.mxu0 0.0
    %413 = vmatpush1.msra.mxu0 0.0
    %414 = vmatprep.subr.mxu0 0.0
    %415 = vmatpush1.msra.mxu0 0.0
    %416 = vmatprep.subr.mxu0 0.0
    %417 = vmatpush1.msra.mxu0 0.0
    %418 = vmatprep.subr.mxu0 0.0
    %419 = vmatpush1.msra.mxu0 0.0
    %420 = vmatprep.subr.mxu0 0.0
    %421 = vmatpush1.msra.mxu0 0.0
    %422 = vmatprep.subr.mxu0 0.0
    %423 = vmatpush1.msra.mxu0 0.0
    %424 = vmatprep.subr.mxu0 0.0
    %425 = vmatpush1.msra.mxu0 0.0
    %426 = vmatprep.subr.mxu0 0.0
    %427 = vmatpush1.msra.mxu0 0.0
    %428 = vmatprep.subr.mxu0 0.0
    %429 = vmatpush1.msra.mxu0 0.0
    %430 = vmatprep.subr.mxu0 0.0
    %431 = vmatpush1.msra.mxu0 0.0
    %432 = vmatprep.mubr.f32.mxu0 0.0
    %433 = vmatmul.mubr.f32.gmra.mrb[0].mxu0 %v362
    %v434 = vpop.f32.mrb[0].mxu0
    %v435 = vadd.f32 %v358, %v434
    %v436 = vpop.f32.mrb[0].mxu0
    %437 = vdwg.mxu0
    %v438 = vxor.u32 %v435, 2147483648
    %v439 = vmul.f32 %v438, 1.442695
    %v440 = vpow.pop %v439
    %v441 = vadd.f32 %v440, 1.0
    %v442 = vrcp.pop %v441
    %v443 = vmul.f32 1.0, %v442
    %v444 = vlaneseq
    %v445 = vshrl.u32 %v444, 7
    %v446 = vsub.s32 0, %v445
    %v447 = vrot.slane %v443, %v446
    %449 = vbcast.lane.b32.xlu0 %v447, 256
    %v450 = vpop.permute.xlu0 %449
    %s452 = sor.u32 256, 8
    %453 = vbcast.lane.b32.xlu0 %v447, %s452
    %v454 = vpop.permute.xlu0 %453
    %s456 = sor.u32 256, 16
    %457 = vbcast.lane.b32.xlu0 %v447, %s456
    %v458 = vpop.permute.xlu0 %457
    %s460 = sor.u32 256, 24
    %461 = vbcast.lane.b32.xlu0 %v447, %s460
    %v462 = vpop.permute.xlu0 %461
    %v463 = vlaneseq
    %v464 = vshrl.u32 %v463, 7
    %v465 = vsub.s32 1, %v464
    %v466 = vrot.slane %v443, %v465
    %468 = vbcast.lane.b32.xlu0 %v466, 256
    %v469 = vpop.permute.xlu0 %468
    %s471 = sor.u32 256, 8
    %472 = vbcast.lane.b32.xlu0 %v466, %s471
    %v473 = vpop.permute.xlu0 %472
    %s475 = sor.u32 256, 16
    %476 = vbcast.lane.b32.xlu0 %v466, %s475
    %v477 = vpop.permute.xlu0 %476
    %s479 = sor.u32 256, 24
    %480 = vbcast.lane.b32.xlu0 %v466, %s479
    %v481 = vpop.permute.xlu0 %480
    %s483 = sor.u32 256, 32
    %484 = vbcast.lane.b32.xlu0 %v447, %s483
    %v485 = vpop.permute.xlu0 %484
    %s487 = sor.u32 256, 40
    %488 = vbcast.lane.b32.xlu0 %v447, %s487
    %v489 = vpop.permute.xlu0 %488
    %s491 = sor.u32 256, 48
    %492 = vbcast.lane.b32.xlu0 %v447, %s491
    %v493 = vpop.permute.xlu0 %492
    %s495 = sor.u32 256, 56
    %496 = vbcast.lane.b32.xlu0 %v447, %s495
    %v497 = vpop.permute.xlu0 %496
    %s499 = sor.u32 256, 32
    %500 = vbcast.lane.b32.xlu0 %v466, %s499
    %v501 = vpop.permute.xlu0 %500
    %s503 = sor.u32 256, 40
    %504 = vbcast.lane.b32.xlu0 %v466, %s503
    %v505 = vpop.permute.xlu0 %504
    %s507 = sor.u32 256, 48
    %508 = vbcast.lane.b32.xlu0 %v466, %s507
    %v509 = vpop.permute.xlu0 %508
    %s511 = sor.u32 256, 56
    %512 = vbcast.lane.b32.xlu0 %v466, %s511
    %v513 = vpop.permute.xlu0 %512
    %v514 = vmul.f32 %v52, %v450
    %v515 = vmul.f32 %v53, %v450
    %v516 = vmul.f32 %v54, %v454
    %v517 = vmul.f32 %v55, %v454
    %v518 = vmul.f32 %v56, %v458
    %v519 = vmul.f32 %v57, %v458
    %v520 = vmul.f32 %v58, %v462
    %v521 = vmul.f32 %v59, %v462
    %v522 = vmul.f32 %v60, %v469
    %v523 = vmul.f32 %v61, %v469
    %v524 = vmul.f32 %v62, %v473
    %v525 = vmul.f32 %v63, %v473
    %v526 = vmul.f32 %v64, %v477
    %v527 = vmul.f32 %v65, %v477
    %v528 = vmul.f32 %v66, %v481
    %v529 = vmul.f32 %v67, %v481
    %v530 = vmul.f32 %v68, %v485
    %v531 = vmul.f32 %v69, %v485
    %v532 = vmul.f32 %v70, %v489
    %v533 = vmul.f32 %v71, %v489
    %v534 = vmul.f32 %v72, %v493
    %v535 = vmul.f32 %v73, %v493
    %v536 = vmul.f32 %v74, %v497
    %v537 = vmul.f32 %v75, %v497
    %v538 = vmul.f32 %v76, %v501
    %v539 = vmul.f32 %v77, %v501
    %v540 = vmul.f32 %v78, %v505
    %v541 = vmul.f32 %v79, %v505
    %v542 = vmul.f32 %v80, %v509
    %v543 = vmul.f32 %v81, %v509
    %v544 = vmul.f32 %v82, %v513
    %v545 = vmul.f32 %v83, %v513
    %v546 = vadd.f32 %v514, %v530
    %v547 = vadd.f32 %v515, %v531
    %v548 = vadd.f32 %v516, %v532
    %v549 = vadd.f32 %v517, %v533
    %v550 = vadd.f32 %v518, %v534
    %v551 = vadd.f32 %v519, %v535
    %v552 = vadd.f32 %v520, %v536
    %v553 = vadd.f32 %v521, %v537
    %v554 = vadd.f32 %v522, %v538
    %v555 = vadd.f32 %v523, %v539
    %v556 = vadd.f32 %v524, %v540
    %v557 = vadd.f32 %v525, %v541
    %v558 = vadd.f32 %v526, %v542
    %v559 = vadd.f32 %v527, %v543
    %v560 = vadd.f32 %v528, %v544
    %v561 = vadd.f32 %v529, %v545
    %562 = vst [vmem:[#allocation7] sm:$0xff] %v546
    %563 = vst [vmem:[#allocation7 + $0x8] sm:$0xff] %v547
    %564 = vst [vmem:[#allocation7 + $0x10] sm:$0xff] %v548
    %565 = vst [vmem:[#allocation7 + $0x18] sm:$0xff] %v549
    %566 = vst [vmem:[#allocation7 + $0x20] sm:$0xff] %v550
    %567 = vst [vmem:[#allocation7 + $0x28] sm:$0xff] %v551
    %568 = vst [vmem:[#allocation7 + $0x30] sm:$0xff] %v552
    %569 = vst [vmem:[#allocation7 + $0x38] sm:$0xff] %v553
    %570 = vst [vmem:[#allocation7 + $0x40] sm:$0xff] %v554
    %571 = vst [vmem:[#allocation7 + $0x48] sm:$0xff] %v555
    %572 = vst [vmem:[#allocation7 + $0x50] sm:$0xff] %v556
    %573 = vst [vmem:[#allocation7 + $0x58] sm:$0xff] %v557
    %574 = vst [vmem:[#allocation7 + $0x60] sm:$0xff] %v558
    %575 = vst [vmem:[#allocation7 + $0x68] sm:$0xff] %v559
    %576 = vst [vmem:[#allocation7 + $0x70] sm:$0xff] %v560
    %577 = vst [vmem:[#allocation7 + $0x78] sm:$0xff] %v561
    // Predicated region
    $region34: #{tpu_custom_call.1} parent=1 // pred_check
      _
    $region35: #{tpu_custom_call.1} parent=1 // pred_check_branch
      %579 = sbr.rel (0) target = $region37
    $region36: #{tpu_custom_call.1} parent=1 // pred_region
      %s581 = ssub.s32 2048, 2048
      %582 = vsyncadd [#allocation4], %s581
      %s583 = sshll.u32 [#allocation7], 4
      %s584 = int_to_ptr.vmem [resolvable:$true] %s583
      %589 = dma.vmem_to_hbm [thread:$0]  %s584, 2048, %s6, [#allocation4], 256, 256, 16
    $region37: #{tpu_custom_call.1} parent=1 // pred_fallthru
      _
    // Predicated region
    $region38: #{tpu_custom_call.1} parent=1 // pred_check
      _
    $region39: #{tpu_custom_call.1} parent=1 // pred_check_branch
      %591 = sbr.rel (0) target = $region41
    $region40: #{tpu_custom_call.1} parent=1 // pred_region
      %592 = dma.done [#allocation4], 2048
    $region41: #{tpu_custom_call.1} parent=1 // pred_fallthru
      _
    %593 = vsyncpa [#allocation3], 1
    %594 = vsyncpa [#allocation6], 1
    %595 = vsyncpa [#allocation4], 1

</llo_original>
